<compile_context>
chip_gen: v5e
topology: v5e:2x2
jax: 0.10.0
libtpu: 0.0.40
codegen_flags: <defaults>
</compile_context>

<pallas_src>
import math
import functools

import jax
import jax.numpy as jnp
from jax import lax
from jax.experimental import pallas as pl
from jax.experimental.pallas import tpu as pltpu


def _round_up(x, m):
    return ((x + m - 1) // m) * m


def _arc_margin_kernel(x_ref, w_ref, label_ref, out_ref, *,
                       cos_m, sin_m, th, mmm, scale, easy_margin,
                       tn, matmul_dtype):
    j = pl.program_id(0)

    x = x_ref[...]            # (B, D)   f32, resident across tiles
    w = w_ref[...]            # (TN, D)  f32, streamed class tile j
    labels = label_ref[...]   # (B, 1)   int32, resident

    # F.normalize(p=2, dim=1): x / max(||x||, 1e-12)  ==  x * rsqrt(max(sumsq, 1e-24))
    eps2 = 1e-24
    x_inv = lax.rsqrt(jnp.maximum(jnp.sum(x * x, axis=-1, keepdims=True), eps2))
    w_inv = lax.rsqrt(jnp.maximum(jnp.sum(w * w, axis=-1, keepdims=True), eps2))
    x_n = (x * x_inv).astype(matmul_dtype)
    w_n = (w * w_inv).astype(matmul_dtype)

    # cosine = x_n @ w_n^T without materializing a transpose: contract last dims.
    cosine = lax.dot_general(
        x_n, w_n,
        dimension_numbers=(((1,), (1,)), ((), ())),
        preferred_element_type=jnp.float32)                       # (B, TN) f32

    # Arc-margin math, all f32. The clamp only differs from the PyTorch forward
    # where PyTorch would emit NaN (cosine rounding slightly above 1, e.g. with
    # bf16 matmul operands).
    sine = jnp.sqrt(jnp.maximum(1.0 - cosine * cosine, 0.0))
    phi = cosine * cos_m - sine * sin_m
    if easy_margin:
        phi = jnp.where(cosine > 0.0, phi, cosine)
    else:
        phi = jnp.where(cosine > th, phi, cosine - mmm)

    # one_hot.scatter_(1, label, 1) blend, fused into one select. The class
    # iota is offset by this tile's starting class index.
    col = lax.broadcasted_iota(jnp.int32, cosine.shape, 1) + j * tn
    out_ref[...] = (jnp.where(col == labels, phi, cosine) * scale).astype(out_ref.dtype)


def arc_margin_product(x, weight, label, *, scale=32.0, margin=0.2,
                       easy_margin=False, tn=512, matmul_dtype=jnp.float32):
    """Pallas implementation of ArcMarginProduct.forward(input, label).

    tn: class-axis tile (rounded to a multiple of 128). Size it per chip
        generation; 512 is a safe default for v5e/v6e/v7x VMEM budgets.
    matmul_dtype: jnp.float32 (bit-faithful) or jnp.bfloat16 (MXU fast path,
        f32 accumulation; elementwise tail stays f32).
    """
    B, D = x.shape
    N, Dw = weight.shape
    assert D == Dw, "in_features mismatch between input and weight"

    # Lane-dense tiling of the class axis.
    tn = max(128, _round_up(int(tn), 128))
    n128 = _round_up(N, 128)
    tn = min(tn, n128)
    n_pad = _round_up(n128, tn)
    grid = n_pad // tn

    w_pad = weight if n_pad == N else jnp.pad(weight, ((0, n_pad - N), (0, 0)))
    label2d = label.reshape(-1, 1).astype(jnp.int32)

    cos_m = math.cos(margin)
    sin_m = math.sin(margin)
    th = math.cos(math.pi - margin)
    mmm = 1.0 + math.cos(math.pi - margin)

    kernel = functools.partial(
        _arc_margin_kernel,
        cos_m=cos_m, sin_m=sin_m, th=th, mmm=mmm,
        scale=scale, easy_margin=easy_margin,
        tn=tn, matmul_dtype=matmul_dtype,
    )

    out = pl.pallas_call(
        kernel,
        out_shape=jax.ShapeDtypeStruct((B, n_pad), jnp.float32),
        grid=(grid,),
        in_specs=[
            pl.BlockSpec((B, D), lambda j: (0, 0)),    # x: resident full block
            pl.BlockSpec((tn, D), lambda j: (j, 0)),   # W: streamed class tile
            pl.BlockSpec((B, 1), lambda j: (0, 0)),    # labels: resident
        ],
        out_specs=pl.BlockSpec((B, tn), lambda j: (0, j)),
        compiler_params=pltpu.CompilerParams(
            dimension_semantics=("parallel",)),        # megacore-shardable on v7x
    )(x.astype(jnp.float32), w_pad.astype(jnp.float32), label2d)

    return out[:, :N] if n_pad != N else out


def _reference(x, weight, label, *, scale=32.0, margin=0.2, easy_margin=False):
    """Pure-JAX reference mirroring the PyTorch forward."""
    cos_m = math.cos(margin)
    sin_m = math.sin(margin)
    th = math.cos(math.pi - margin)
    mmm = 1.0 + math.cos(math.pi - margin)
    eps = 1e-12

    x_n = x / jnp.maximum(jnp.linalg.norm(x, axis=1, keepdims=True), eps)
    w_n = weight / jnp.maximum(jnp.linalg.norm(weight, axis=1, keepdims=True), eps)
    cosine = x_n @ w_n.T
    sine = jnp.sqrt(1.0 - cosine ** 2)
    phi = cosine * cos_m - sine * sin_m
    if easy_margin:
        phi = jnp.where(cosine > 0.0, phi, cosine)
    else:
        phi = jnp.where(cosine > th, phi, cosine - mmm)
    one_hot = jax.nn.one_hot(label, cosine.shape[1], dtype=cosine.dtype)
    return (one_hot * phi + (1.0 - one_hot) * cosine) * scale


if __name__ == "__main__":
    key = jax.random.PRNGKey(0)
    k_x, k_w, k_l = jax.random.split(key, 3)

    B = 8
    in_features = 64
    out_features = 200   # not a multiple of 128 -> exercises padding + slicing

    # Deterministic parameter init (xavier_uniform_ equivalent).
    limit = math.sqrt(6.0 / (in_features + out_features))
    weight = jax.random.uniform(
        k_w, (out_features, in_features),
        minval=-limit, maxval=limit, dtype=jnp.float32)

    x = jax.random.normal(k_x, (B, in_features), dtype=jnp.float32)
    label = jax.random.randint(k_l, (B,), 0, out_features, dtype=jnp.int32)

    ref = _reference(x, weight, label, scale=32.0, margin=0.2, easy_margin=False)

    # f32 matmul path (faithful to the PyTorch forward): tn=128 -> 2 class tiles,
    # exercising the per-tile iota offset and the padded/sliced output.
    out = arc_margin_product(x, weight, label, scale=32.0, margin=0.2,
                             easy_margin=False, tn=128,
                             matmul_dtype=jnp.float32)
    out = jax.block_until_ready(out)
    assert out.shape == (B, out_features)
    assert jnp.allclose(out, ref, atol=1e-4, rtol=1e-4), "f32 mismatch vs reference"

    # bf16-operand MXU fast path (f32 accumulation + f32 elementwise tail).
    out_bf16 = arc_margin_product(x, weight, label, scale=32.0, margin=0.2,
                                  easy_margin=False, tn=128,
                                  matmul_dtype=jnp.bfloat16)
    out_bf16 = jax.block_until_ready(out_bf16)
    assert out_bf16.shape == (B, out_features)
    assert bool(jnp.all(jnp.isfinite(out_bf16)))
    assert float(jnp.max(jnp.abs(out_bf16 - ref))) < 0.5, "bf16 path drifted too far"

    print("KERNEL_OK")
</pallas_src>

<mosaic_0001>
module attributes {stable_mosaic.version = 11 : i64} {
  func.func @_arc_margin_kernel(%arg0: i32, %arg1: memref<8x64xf32, #tpu.memory_space<vmem>>, %arg2: memref<128x64xf32, #tpu.memory_space<vmem>>, %arg3: memref<8x1xi32, #tpu.memory_space<vmem>>, %arg4: memref<8x128xf32, #tpu.memory_space<vmem>>) attributes {dimension_semantics = [#tpu.dimension_semantics<parallel>], iteration_bounds = array<i64: 2>, scalar_prefetch = 0 : i64, scratch_operands = 0 : i64, tpu.core_type = #tpu.core_type<tc>, window_params = [{pipeline_mode = #tpu.pipeline_mode<synchronous>, transform_indices = @transform_0, window_bounds = array<i64: 8, 64>}, {transform_indices = @transform_1, window_bounds = array<i64: 128, 64>}, {pipeline_mode = #tpu.pipeline_mode<synchronous>, transform_indices = @transform_2, window_bounds = array<i64: 8, 1>}, {transform_indices = @transform_3, window_bounds = array<i64: 8, 128>}]} {
    %c0 = arith.constant 0 : index
    %c0_0 = arith.constant 0 : index
    %0 = vector.load %arg1[%c0, %c0_0] : memref<8x64xf32, #tpu.memory_space<vmem>>, vector<8x64xf32>
    %c0_1 = arith.constant 0 : index
    %c0_2 = arith.constant 0 : index
    %1 = vector.load %arg2[%c0_1, %c0_2] : memref<128x64xf32, #tpu.memory_space<vmem>>, vector<128x64xf32>
    %c0_3 = arith.constant 0 : index
    %c0_4 = arith.constant 0 : index
    %2 = vector.load %arg3[%c0_3, %c0_4] : memref<8x1xi32, #tpu.memory_space<vmem>>, vector<8x1xi32>
    %3 = arith.mulf %0, %0 : vector<8x64xf32>
    %cst = arith.constant dense<0.000000e+00> : vector<8xf32>
    %4 = vector.multi_reduction <add>, %3, %cst [1] : vector<8x64xf32> to vector<8xf32>
    %5 = vector.shape_cast %4 : vector<8xf32> to vector<8x1xf32>
    %cst_5 = arith.constant 1.000000e-24 : f32
    %6 = vector.broadcast %cst_5 : f32 to vector<8x1xf32>
    %7 = arith.maximumf %5, %6 : vector<8x1xf32>
    %8 = math.rsqrt %7 : vector<8x1xf32>
    %9 = arith.mulf %1, %1 : vector<128x64xf32>
    %cst_6 = arith.constant dense<0.000000e+00> : vector<128xf32>
    %10 = vector.multi_reduction <add>, %9, %cst_6 [1] : vector<128x64xf32> to vector<128xf32>
    %11 = vector.shape_cast %10 : vector<128xf32> to vector<128x1xf32>
    %cst_7 = arith.constant 1.000000e-24 : f32
    %12 = vector.broadcast %cst_7 : f32 to vector<128x1xf32>
    %13 = arith.maximumf %11, %12 : vector<128x1xf32>
    %14 = math.rsqrt %13 : vector<128x1xf32>
    %15 = vector.broadcast %8 : vector<8x1xf32> to vector<8x64xf32>
    %16 = arith.mulf %0, %15 : vector<8x64xf32>
    %17 = vector.broadcast %14 : vector<128x1xf32> to vector<128x64xf32>
    %18 = arith.mulf %1, %17 : vector<128x64xf32>
    %cst_8 = arith.constant dense<0.000000e+00> : vector<8x128xf32>
    %19 = tpu.matmul %16, %18, %cst_8 {dimension_numbers = #tpu.dot_dimension_numbers<[1], [1], [0], [0], [0, 0, 1, 0], [], []>} : vector<8x64xf32>, vector<128x64xf32>, vector<8x128xf32> -> vector<8x128xf32>
    %20 = arith.mulf %19, %19 : vector<8x128xf32>
    %cst_9 = arith.constant 1.000000e+00 : f32
    %21 = vector.broadcast %cst_9 : f32 to vector<8x128xf32>
    %22 = arith.subf %21, %20 : vector<8x128xf32>
    %cst_10 = arith.constant 0.000000e+00 : f32
    %23 = vector.broadcast %cst_10 : f32 to vector<8x128xf32>
    %24 = arith.maximumf %22, %23 : vector<8x128xf32>
    %25 = math.sqrt %24 : vector<8x128xf32>
    %cst_11 = arith.constant 0.980066597 : f32
    %26 = vector.broadcast %cst_11 : f32 to vector<8x128xf32>
    %27 = arith.mulf %19, %26 : vector<8x128xf32>
    %cst_12 = arith.constant 0.198669329 : f32
    %28 = vector.broadcast %cst_12 : f32 to vector<8x128xf32>
    %29 = arith.mulf %25, %28 : vector<8x128xf32>
    %30 = arith.subf %27, %29 : vector<8x128xf32>
    %cst_13 = arith.constant -0.980066597 : f32
    %31 = vector.broadcast %cst_13 : f32 to vector<8x128xf32>
    %32 = arith.cmpf ogt, %19, %31 : vector<8x128xf32>
    %cst_14 = arith.constant 0.019933423 : f32
    %33 = vector.broadcast %cst_14 : f32 to vector<8x128xf32>
    %34 = arith.subf %19, %33 : vector<8x128xf32>
    %35 = arith.select %32, %30, %34 : vector<8x128xi1>, vector<8x128xf32>
    %36 = tpu.iota {dimensions = array<i32: 1>} : vector<8x128xi32>
    %c128_i32 = arith.constant 128 : i32
    %37 = arith.muli %arg0, %c128_i32 : i32
    %38 = vector.broadcast %37 : i32 to vector<8x128xi32>
    %39 = arith.addi %36, %38 : vector<8x128xi32>
    %40 = vector.broadcast %2 : vector<8x1xi32> to vector<8x128xi32>
    %41 = arith.cmpi eq, %39, %40 : vector<8x128xi32>
    %42 = arith.select %41, %35, %19 : vector<8x128xi1>, vector<8x128xf32>
    %cst_15 = arith.constant 3.200000e+01 : f32
    %43 = vector.broadcast %cst_15 : f32 to vector<8x128xf32>
    %44 = arith.mulf %42, %43 : vector<8x128xf32>
    %c0_16 = arith.constant 0 : index
    %c0_17 = arith.constant 0 : index
    %45 = vector.load %arg4[%c0_16, %c0_17] : memref<8x128xf32, #tpu.memory_space<vmem>>, vector<8x128xf32>
    tpu.vector_store %arg4[%c0_16, %c0_17], %44 {strides = array<i32>} : memref<8x128xf32, #tpu.memory_space<vmem>>, vector<8x128xf32>,
    return
  }
  func.func @transform_0(%arg0: i32) -> (i32, i32) {
    %c0_i32 = arith.constant 0 : i32
    %c0_i32_0 = arith.constant 0 : i32
    %c0_i32_1 = arith.constant 0 : i32
    return %c0_i32, %c0_i32_0 : i32, i32
  }
  func.func @transform_1(%arg0: i32) -> (i32, i32) {
    %c0_i32 = arith.constant 0 : i32
    %c0_i32_0 = arith.constant 0 : i32
    return %arg0, %c0_i32 : i32, i32
  }
  func.func @transform_2(%arg0: i32) -> (i32, i32) {
    %c0_i32 = arith.constant 0 : i32
    %c0_i32_0 = arith.constant 0 : i32
    %c0_i32_1 = arith.constant 0 : i32
    return %c0_i32, %c0_i32_0 : i32, i32
  }
  func.func @transform_3(%arg0: i32) -> (i32, i32) {
    %c0_i32 = arith.constant 0 : i32
    %c0_i32_0 = arith.constant 0 : i32
    return %c0_i32, %arg0 : i32, i32
  }
}

</mosaic_0001>

<llo_original>
// kernel: tpu_custom_call.1
$region0: #{tpu_custom_call.1}
  #allocation0 [shape = 'u32[]', space=smem, size = 0x4, offset = 0x4, fixed_abs, tag = 'smem constant byte address 0x4 - core index']
  #allocation1 [shape = 'u32[72,128]{1,0:T(1,128)}', space=vmem, size = 0x9000, scoped, tag = 'internal scratch']
  %s0 = inlined_call_operand.vmem [shape: f32[8,64], index: 0, kind: input, shape index: {}]
  %s1 = inlined_call_operand.vmem [shape: f32[256,64], index: 1, kind: input, shape index: {}]
  %s2 = inlined_call_operand.vmem [shape: s32[8,1], index: 2, kind: input, shape index: {}]
  %s3 = inlined_call_operand.hbm [shape: f32[8,256], index: 3, kind: output, shape index: {}]
  %s4 = sld [smem:[#allocation0]]
  $region45: #{tpu_custom_call.1} parent=0
    _
  %s6 = ssub.s32 1, %s4
  %s7 = scalar_select 0, %s6, %s4
  $region1: #{tpu_custom_call.1} parent=0
    #allocation2 [shape = 'u8[8192]{0}', space=vmem, size = 0x2000, scoped, tag = 'output window, operand 0']
    #allocation3 [shape = 's32[2]{0}', space=sflag, size = 0x8, scoped, tag = 'scoped memory for tpu_custom_call.1']
    %8 = vsyncpa [#allocation3], 0
    %s9 = scalar_lea.sflag [#allocation3], 1
    %10 = vsyncpa %s9, 0
    loop: start=0, step=1, limit=4
    $region2: #{tpu_custom_call.1} parent=1 // loop_pre_header
      _
    $region3: #{tpu_custom_call.1} parent=1 // loop_header
      %s12 = sphi 0, %s16
      %p13 = scmp.ge.s32.totalorder %s12, 4
      %s20 = sphi 0, %s20
      %s22 = sphi 0, %s20
      %s23 = sphi 0, %s22
      %s37 = sphi 0, %s23
      %s43 = sphi 0, %s45
      %s46 = sphi 0, %s43
      %s47 = sphi 0, %s46
      %s63 = sphi 0, %s47
      %s67 = sphi 0, %s67
      %s69 = sphi 0, %s67
      %s70 = sphi 0, %s69
      %s84 = sphi 0, %s70
      %s90 = sphi 0, %s92
      %s93 = sphi 0, %s90
      %s94 = sphi 0, %s93
      %s110 = sphi 0, %s94
    $region4: #{tpu_custom_call.1} parent=1 // loop_header_branch
      %15 = sbr.rel (%p13) target = $region8
    $region5: #{tpu_custom_call.1} parent=1 // loop_body
      %s17 = ssub.s32 %s12, 1
      %s18 = ssub.s32 %s12, 2
      %s19 = sadd.s32 %s12, 1
      %s21 = sadd.s32 %s20, 1
      %p24 = scmp.eq.s32.totalorder %s12, 1
      %p25 = scmp.ne.s32.totalorder %s20, %s22
      %p26 = scmp.eq.s32.totalorder %s12, 0
      %p27 = por %p25, %p26
      %p28 = scmp.ne.s32.totalorder %s20, %s22
      %p29 = scmp.eq.s32.totalorder %s17, 1
      %p30 = por %p28, %p29
      %p31 = scmp.ne.s32.totalorder %s22, %s23
      %p32 = scmp.eq.s32.totalorder %s17, 0
      %p33 = por %p31, %p32
      %p34 = scmp.ne.s32.totalorder %s22, %s23
      %p35 = scmp.eq.s32.totalorder %s18, 1
      %p36 = por %p34, %p35
      %p38 = scmp.ne.s32.totalorder %s23, %s37
      %p39 = scmp.eq.s32.totalorder %s18, 0
      %p40 = por %p38, %p39
      %s41 = ssub.s32 %s12, %s19
      %p42 = scmp.eq.s32.totalorder %s41, 0
      %s44 = sadd.s32 %s43, 1
      %s45 = scalar_select %p42, %s43, %s44
      %p48 = pneg %p42
      %p49 = scmp.eq.s32.totalorder %s12, 1
      %p50 = por %p48, %p49
      %p51 = scmp.ne.s32.totalorder %s43, %s46
      %p52 = scmp.eq.s32.totalorder %s12, 0
      %p53 = por %p51, %p52
      %p54 = scmp.ne.s32.totalorder %s43, %s46
      %p55 = scmp.eq.s32.totalorder %s17, 1
      %p56 = por %p54, %p55
      %p57 = scmp.ne.s32.totalorder %s46, %s47
      %p58 = scmp.eq.s32.totalorder %s17, 0
      %p59 = por %p57, %p58
      %p60 = scmp.ne.s32.totalorder %s46, %s47
      %p61 = scmp.eq.s32.totalorder %s18, 1
      %p62 = por %p60, %p61
      %p64 = scmp.ne.s32.totalorder %s47, %s63
      %p65 = scmp.eq.s32.totalorder %s18, 0
      %p66 = por %p64, %p65
      %s68 = sadd.s32 %s67, 1
      %p71 = scmp.eq.s32.totalorder %s12, 1
      %p72 = scmp.ne.s32.totalorder %s67, %s69
      %p73 = scmp.eq.s32.totalorder %s12, 0
      %p74 = por %p72, %p73
      %p75 = scmp.ne.s32.totalorder %s67, %s69
      %p76 = scmp.eq.s32.totalorder %s17, 1
      %p77 = por %p75, %p76
      %p78 = scmp.ne.s32.totalorder %s69, %s70
      %p79 = scmp.eq.s32.totalorder %s17, 0
      %p80 = por %p78, %p79
      %p81 = scmp.ne.s32.totalorder %s69, %s70
      %p82 = scmp.eq.s32.totalorder %s18, 1
      %p83 = por %p81, %p82
      %p85 = scmp.ne.s32.totalorder %s70, %s84
      %p86 = scmp.eq.s32.totalorder %s18, 0
      %p87 = por %p85, %p86
      %s88 = ssub.s32 %s12, %s19
      %p89 = scmp.eq.s32.totalorder %s88, 0
      %s91 = sadd.s32 %s90, 1
      %s92 = scalar_select %p89, %s90, %s91
      %p95 = pneg %p89
      %p96 = scmp.eq.s32.totalorder %s12, 1
      %p97 = por %p95, %p96
      %p98 = scmp.ne.s32.totalorder %s90, %s93
      %p99 = scmp.eq.s32.totalorder %s12, 0
      %p100 = por %p98, %p99
      %p101 = scmp.ne.s32.totalorder %s90, %s93
      %p102 = scmp.eq.s32.totalorder %s17, 1
      %p103 = por %p101, %p102
      %p104 = scmp.ne.s32.totalorder %s93, %s94
      %p105 = scmp.eq.s32.totalorder %s17, 0
      %p106 = por %p104, %p105
      %p107 = scmp.ne.s32.totalorder %s93, %s94
      %p108 = scmp.eq.s32.totalorder %s18, 1
      %p109 = por %p107, %p108
      %p111 = scmp.ne.s32.totalorder %s94, %s110
      %p112 = scmp.eq.s32.totalorder %s18, 0
      %p113 = por %p111, %p112
      %p114 = scmp.le.s32.totalorder 1, %s12
      %p115 = scmp.lt.s32.totalorder %s12, 3
      %p116 = pnand %p114, %p115
      %p117 = pneg %p116
      // Predicated region
      $region9: #{tpu_custom_call.1} parent=5 // pred_check
        _
      $region10: #{tpu_custom_call.1} parent=5 // pred_check_branch
        %119 = sbr.rel (%p116) target = $region12
      $region11: #{tpu_custom_call.1} parent=5 // pred_region
        %s120 = ssub.s32 %s12, 1
        // Predicated region
        $region13: #{tpu_custom_call.1} parent=11 // pred_check
          %p121 = pneg %p33
        $region14: #{tpu_custom_call.1} parent=11 // pred_check_branch
          %123 = sbr.rel (%p121) target = $region16
        $region15: #{tpu_custom_call.1} parent=11 // pred_region
          _
        $region16: #{tpu_custom_call.1} parent=11 // pred_fallthru
          _
        // Predicated region
        $region17: #{tpu_custom_call.1} parent=11 // pred_check
          %p124 = pneg %p80
        $region18: #{tpu_custom_call.1} parent=11 // pred_check_branch
          %126 = sbr.rel (%p124) target = $region20
        $region19: #{tpu_custom_call.1} parent=11 // pred_region
          _
        $region20: #{tpu_custom_call.1} parent=11 // pred_fallthru
          _
      $region12: #{tpu_custom_call.1} parent=5 // pred_fallthru
        _
      %p127 = scmp.lt.s32.totalorder %s12, 2
      // Predicated region
      $region21: #{tpu_custom_call.1} parent=5 // pred_check
        %p128 = pneg %p127
      $region22: #{tpu_custom_call.1} parent=5 // pred_check_branch
        %130 = sbr.rel (%p128) target = $region24
      $region23: #{tpu_custom_call.1} parent=5 // pred_region
        // Predicated region
        $region25: #{tpu_custom_call.1} parent=23 // pred_check
          %p131 = pneg %p53
        $region26: #{tpu_custom_call.1} parent=23 // pred_check_branch
          %133 = sbr.rel (%p131) target = $region28
        $region27: #{tpu_custom_call.1} parent=23 // pred_region
          %s134 = smul.u32 16, %s12
          %p135 = scmp.lt.s32.totalorder %s134, 31
          %s136 = scalar_select %p135, %s134, 31
          %s137 = smul.addr %s136, 8
          %s138 = scalar_lea.vmem %s1, %s137
          %s139 = smul.u32 16, %s12
        $region28: #{tpu_custom_call.1} parent=23 // pred_fallthru
          _
      $region24: #{tpu_custom_call.1} parent=5 // pred_fallthru
        _
      %p140 = scmp.le.s32.totalorder 1, %s12
      %p141 = scmp.lt.s32.totalorder %s12, 3
      %p142 = pnand %p140, %p141
      %p143 = pneg %p142
      // Predicated region
      $region29: #{tpu_custom_call.1} parent=5 // pred_check
        _
      $region30: #{tpu_custom_call.1} parent=5 // pred_check_branch
        %145 = sbr.rel (%p142) target = $region32
      $region31: #{tpu_custom_call.1} parent=5 // pred_region
        %s146 = ssub.s32 %s12, 1
        %p147 = pneg %p33
        %p148 = pneg %p30
        %s149 = smul.u32 16, %s17
        %p150 = scmp.lt.s32.totalorder %s149, 31
        %s151 = scalar_select %p150, %s149, 31
        %s152 = smul.addr %s151, 8
        %s153 = scalar_lea.vmem %s1, %s152
        %p154 = pneg %p59
        %p155 = pneg %p56
        %p156 = pneg %p80
        %p157 = pneg %p77
        %p158 = pneg %p106
        %p159 = pneg %p103
        %s160 = sand.u32 %s93, 1
        %s161 = scalar_lea.sflag [#allocation3], %s160
        %s162 = sand.u32 %s93, 1
        %s163 = smul.addr %s162, 8
        %s164 = scalar_lea.vmem [#allocation2], %s163
        %s165 = smul.u32 16, %s17
        %p166 = scmp.lt.s32.totalorder %s165, 31
        %s167 = scalar_select %p166, %s165, 31
        %s168 = smul.addr %s167, 8
        %s169 = scalar_lea.vmem %s1, %s168
        %s170 = smul.u32 16, %s17
        %v171 = vld [vmem:[%s0] sm:$0xff]
        %v172 = vld [vmem:[%s169] sm:$0xff]
        %v173 = vld [vmem:[%s169 + $0x8] sm:$0xff]
        %v174 = vld [vmem:[%s169 + $0x10] sm:$0xff]
        %v175 = vld [vmem:[%s169 + $0x18] sm:$0xff]
        %v176 = vld [vmem:[%s169 + $0x20] sm:$0xff]
        %v177 = vld [vmem:[%s169 + $0x28] sm:$0xff]
        %v178 = vld [vmem:[%s169 + $0x30] sm:$0xff]
        %v179 = vld [vmem:[%s169 + $0x38] sm:$0xff]
        %v180 = vld [vmem:[%s169 + $0x40] sm:$0xff]
        %v181 = vld [vmem:[%s169 + $0x48] sm:$0xff]
        %v182 = vld [vmem:[%s169 + $0x50] sm:$0xff]
        %v183 = vld [vmem:[%s169 + $0x58] sm:$0xff]
        %v184 = vld [vmem:[%s169 + $0x60] sm:$0xff]
        %v185 = vld [vmem:[%s169 + $0x68] sm:$0xff]
        %v186 = vld [vmem:[%s169 + $0x70] sm:$0xff]
        %v187 = vld [vmem:[%s169 + $0x78] sm:$0xff]
        %v188 = vld [vmem:[%s2] sm:$0xff]
        %v189 = vmul.f32 %v171, %v171
        %vm190 = vcmask 523264
        %v191 = vsel %vm190, %v189, 0.0
        %192 = vadd.xlane.f32.xlu0 %v191
        %v193 = vpop.xlane.xlu0 %192
        %v194 = vmax.f32 %v193, 1e-24
        %v195 = vrsqrt.pop %v194
        %v196 = vmul.f32 %v195, %v194
        %v197 = vmul.f32 %v196, %v195
        %v198 = vmul.f32 0.5, %v197
        %v199 = vsub.f32 1.5, %v198
        %v200 = vmul.f32 %v195, %v199
        %vm201 = vweird.f32 %v194
        %vm202 = vweird.f32 %v195
        %vm203 = vmor %vm201, %vm202
        %v204 = vsel %vm203, %v195, %v200
        %v205 = vmul.f32 %v172, %v172
        %v206 = vmul.f32 %v173, %v173
        %v207 = vmul.f32 %v174, %v174
        %v208 = vmul.f32 %v175, %v175
        %v209 = vmul.f32 %v176, %v176
        %v210 = vmul.f32 %v177, %v177
        %v211 = vmul.f32 %v178, %v178
        %v212 = vmul.f32 %v179, %v179
        %v213 = vmul.f32 %v180, %v180
        %v214 = vmul.f32 %v181, %v181
        %v215 = vmul.f32 %v182, %v182
        %v216 = vmul.f32 %v183, %v183
        %v217 = vmul.f32 %v184, %v184
        %v218 = vmul.f32 %v185, %v185
        %v219 = vmul.f32 %v186, %v186
        %v220 = vmul.f32 %v187, %v187
        %v221 = vsel %vm190, %v205, 0.0
        %222 = vadd.xlane.f32.xlu0 %v221
        %v223 = vpop.xlane.xlu0 %222
        %v224 = vsel %vm190, %v206, 0.0
        %225 = vadd.xlane.f32.xlu0 %v224
        %v226 = vpop.xlane.xlu0 %225
        %v227 = vsel %vm190, %v207, 0.0
        %228 = vadd.xlane.f32.xlu0 %v227
        %v229 = vpop.xlane.xlu0 %228
        %v230 = vsel %vm190, %v208, 0.0
        %231 = vadd.xlane.f32.xlu0 %v230
        %v232 = vpop.xlane.xlu0 %231
        %v233 = vsel %vm190, %v209, 0.0
        %234 = vadd.xlane.f32.xlu0 %v233
        %v235 = vpop.xlane.xlu0 %234
        %v236 = vsel %vm190, %v210, 0.0
        %237 = vadd.xlane.f32.xlu0 %v236
        %v238 = vpop.xlane.xlu0 %237
        %v239 = vsel %vm190, %v211, 0.0
        %240 = vadd.xlane.f32.xlu0 %v239
        %v241 = vpop.xlane.xlu0 %240
        %v242 = vsel %vm190, %v212, 0.0
        %243 = vadd.xlane.f32.xlu0 %v242
        %v244 = vpop.xlane.xlu0 %243
        %v245 = vsel %vm190, %v213, 0.0
        %246 = vadd.xlane.f32.xlu0 %v245
        %v247 = vpop.xlane.xlu0 %246
        %v248 = vsel %vm190, %v214, 0.0
        %249 = vadd.xlane.f32.xlu0 %v248
        %v250 = vpop.xlane.xlu0 %249
        %v251 = vsel %vm190, %v215, 0.0
        %252 = vadd.xlane.f32.xlu0 %v251
        %v253 = vpop.xlane.xlu0 %252
        %v254 = vsel %vm190, %v216, 0.0
        %255 = vadd.xlane.f32.xlu0 %v254
        %v256 = vpop.xlane.xlu0 %255
        %v257 = vsel %vm190, %v217, 0.0
        %258 = vadd.xlane.f32.xlu0 %v257
        %v259 = vpop.xlane.xlu0 %258
        %v260 = vsel %vm190, %v218, 0.0
        %261 = vadd.xlane.f32.xlu0 %v260
        %v262 = vpop.xlane.xlu0 %261
        %v263 = vsel %vm190, %v219, 0.0
        %264 = vadd.xlane.f32.xlu0 %v263
        %v265 = vpop.xlane.xlu0 %264
        %v266 = vsel %vm190, %v220, 0.0
        %267 = vadd.xlane.f32.xlu0 %v266
        %v268 = vpop.xlane.xlu0 %267
        %v269 = vmax.f32 %v223, 1e-24
        %v270 = vmax.f32 %v226, 1e-24
        %v271 = vmax.f32 %v229, 1e-24
        %v272 = vmax.f32 %v232, 1e-24
        %v273 = vmax.f32 %v235, 1e-24
        %v274 = vmax.f32 %v238, 1e-24
        %v275 = vmax.f32 %v241, 1e-24
        %v276 = vmax.f32 %v244, 1e-24
        %v277 = vmax.f32 %v247, 1e-24
        %v278 = vmax.f32 %v250, 1e-24
        %v279 = vmax.f32 %v253, 1e-24
        %v280 = vmax.f32 %v256, 1e-24
        %v281 = vmax.f32 %v259, 1e-24
        %v282 = vmax.f32 %v262, 1e-24
        %v283 = vmax.f32 %v265, 1e-24
        %v284 = vmax.f32 %v268, 1e-24
        %v285 = vrsqrt.pop %v269
        %v286 = vmul.f32 %v285, %v269
        %v287 = vmul.f32 %v286, %v285
        %v288 = vmul.f32 0.5, %v287
        %v289 = vsub.f32 1.5, %v288
        %v290 = vmul.f32 %v285, %v289
        %vm291 = vweird.f32 %v269
        %vm292 = vweird.f32 %v285
        %vm293 = vmor %vm291, %vm292
        %v294 = vsel %vm293, %v285, %v290
        %v295 = vrsqrt.pop %v270
        %v296 = vmul.f32 %v295, %v270
        %v297 = vmul.f32 %v296, %v295
        %v298 = vmul.f32 0.5, %v297
        %v299 = vsub.f32 1.5, %v298
        %v300 = vmul.f32 %v295, %v299
        %vm301 = vweird.f32 %v270
        %vm302 = vweird.f32 %v295
        %vm303 = vmor %vm301, %vm302
        %v304 = vsel %vm303, %v295, %v300
        %v305 = vrsqrt.pop %v271
        %v306 = vmul.f32 %v305, %v271
        %v307 = vmul.f32 %v306, %v305
        %v308 = vmul.f32 0.5, %v307
        %v309 = vsub.f32 1.5, %v308
        %v310 = vmul.f32 %v305, %v309
        %vm311 = vweird.f32 %v271
        %vm312 = vweird.f32 %v305
        %vm313 = vmor %vm311, %vm312
        %v314 = vsel %vm313, %v305, %v310
        %v315 = vrsqrt.pop %v272
        %v316 = vmul.f32 %v315, %v272
        %v317 = vmul.f32 %v316, %v315
        %v318 = vmul.f32 0.5, %v317
        %v319 = vsub.f32 1.5, %v318
        %v320 = vmul.f32 %v315, %v319
        %vm321 = vweird.f32 %v272
        %vm322 = vweird.f32 %v315
        %vm323 = vmor %vm321, %vm322
        %v324 = vsel %vm323, %v315, %v320
        %v325 = vrsqrt.pop %v273
        %v326 = vmul.f32 %v325, %v273
        %v327 = vmul.f32 %v326, %v325
        %v328 = vmul.f32 0.5, %v327
        %v329 = vsub.f32 1.5, %v328
        %v330 = vmul.f32 %v325, %v329
        %vm331 = vweird.f32 %v273
        %vm332 = vweird.f32 %v325
        %vm333 = vmor %vm331, %vm332
        %v334 = vsel %vm333, %v325, %v330
        %v335 = vrsqrt.pop %v274
        %v336 = vmul.f32 %v335, %v274
        %v337 = vmul.f32 %v336, %v335
        %v338 = vmul.f32 0.5, %v337
        %v339 = vsub.f32 1.5, %v338
        %v340 = vmul.f32 %v335, %v339
        %vm341 = vweird.f32 %v274
        %vm342 = vweird.f32 %v335
        %vm343 = vmor %vm341, %vm342
        %v344 = vsel %vm343, %v335, %v340
        %v345 = vrsqrt.pop %v275
        %v346 = vmul.f32 %v345, %v275
        %v347 = vmul.f32 %v346, %v345
        %v348 = vmul.f32 0.5, %v347
        %v349 = vsub.f32 1.5, %v348
        %v350 = vmul.f32 %v345, %v349
        %vm351 = vweird.f32 %v275
        %vm352 = vweird.f32 %v345
        %vm353 = vmor %vm351, %vm352
        %v354 = vsel %vm353, %v345, %v350
        %v355 = vrsqrt.pop %v276
        %v356 = vmul.f32 %v355, %v276
        %v357 = vmul.f32 %v356, %v355
        %v358 = vmul.f32 0.5, %v357
        %v359 = vsub.f32 1.5, %v358
        %v360 = vmul.f32 %v355, %v359
        %vm361 = vweird.f32 %v276
        %vm362 = vweird.f32 %v355
        %vm363 = vmor %vm361, %vm362
        %v364 = vsel %vm363, %v355, %v360
        %v365 = vrsqrt.pop %v277
        %v366 = vmul.f32 %v365, %v277
        %v367 = vmul.f32 %v366, %v365
        %v368 = vmul.f32 0.5, %v367
        %v369 = vsub.f32 1.5, %v368
        %v370 = vmul.f32 %v365, %v369
        %vm371 = vweird.f32 %v277
        %vm372 = vweird.f32 %v365
        %vm373 = vmor %vm371, %vm372
        %v374 = vsel %vm373, %v365, %v370
        %v375 = vrsqrt.pop %v278
        %v376 = vmul.f32 %v375, %v278
        %v377 = vmul.f32 %v376, %v375
        %v378 = vmul.f32 0.5, %v377
        %v379 = vsub.f32 1.5, %v378
        %v380 = vmul.f32 %v375, %v379
        %vm381 = vweird.f32 %v278
        %vm382 = vweird.f32 %v375
        %vm383 = vmor %vm381, %vm382
        %v384 = vsel %vm383, %v375, %v380
        %v385 = vrsqrt.pop %v279
        %v386 = vmul.f32 %v385, %v279
        %v387 = vmul.f32 %v386, %v385
        %v388 = vmul.f32 0.5, %v387
        %v389 = vsub.f32 1.5, %v388
        %v390 = vmul.f32 %v385, %v389
        %vm391 = vweird.f32 %v279
        %vm392 = vweird.f32 %v385
        %vm393 = vmor %vm391, %vm392
        %v394 = vsel %vm393, %v385, %v390
        %v395 = vrsqrt.pop %v280
        %v396 = vmul.f32 %v395, %v280
        %v397 = vmul.f32 %v396, %v395
        %v398 = vmul.f32 0.5, %v397
        %v399 = vsub.f32 1.5, %v398
        %v400 = vmul.f32 %v395, %v399
        %vm401 = vweird.f32 %v280
        %vm402 = vweird.f32 %v395
        %vm403 = vmor %vm401, %vm402
        %v404 = vsel %vm403, %v395, %v400
        %v405 = vrsqrt.pop %v281
        %v406 = vmul.f32 %v405, %v281
        %v407 = vmul.f32 %v406, %v405
        %v408 = vmul.f32 0.5, %v407
        %v409 = vsub.f32 1.5, %v408
        %v410 = vmul.f32 %v405, %v409
        %vm411 = vweird.f32 %v281
        %vm412 = vweird.f32 %v405
        %vm413 = vmor %vm411, %vm412
        %v414 = vsel %vm413, %v405, %v410
        %v415 = vrsqrt.pop %v282
        %v416 = vmul.f32 %v415, %v282
        %v417 = vmul.f32 %v416, %v415
        %v418 = vmul.f32 0.5, %v417
        %v419 = vsub.f32 1.5, %v418
        %v420 = vmul.f32 %v415, %v419
        %vm421 = vweird.f32 %v282
        %vm422 = vweird.f32 %v415
        %vm423 = vmor %vm421, %vm422
        %v424 = vsel %vm423, %v415, %v420
        %v425 = vrsqrt.pop %v283
        %v426 = vmul.f32 %v425, %v283
        %v427 = vmul.f32 %v426, %v425
        %v428 = vmul.f32 0.5, %v427
        %v429 = vsub.f32 1.5, %v428
        %v430 = vmul.f32 %v425, %v429
        %vm431 = vweird.f32 %v283
        %vm432 = vweird.f32 %v425
        %vm433 = vmor %vm431, %vm432
        %v434 = vsel %vm433, %v425, %v430
        %v435 = vrsqrt.pop %v284
        %v436 = vmul.f32 %v435, %v284
        %v437 = vmul.f32 %v436, %v435
        %v438 = vmul.f32 0.5, %v437
        %v439 = vsub.f32 1.5, %v438
        %v440 = vmul.f32 %v435, %v439
        %vm441 = vweird.f32 %v284
        %vm442 = vweird.f32 %v435
        %vm443 = vmor %vm441, %vm442
        %v444 = vsel %vm443, %v435, %v440
        %v445 = vmul.f32 %v171, %v204
        %v446 = vmul.f32 %v172, %v294
        %v447 = vmul.f32 %v173, %v304
        %v448 = vmul.f32 %v174, %v314
        %v449 = vmul.f32 %v175, %v324
        %v450 = vmul.f32 %v176, %v334
        %v451 = vmul.f32 %v177, %v344
        %v452 = vmul.f32 %v178, %v354
        %v453 = vmul.f32 %v179, %v364
        %v454 = vmul.f32 %v180, %v374
        %v455 = vmul.f32 %v181, %v384
        %v456 = vmul.f32 %v182, %v394
        %v457 = vmul.f32 %v183, %v404
        %v458 = vmul.f32 %v184, %v414
        %v459 = vmul.f32 %v185, %v424
        %v460 = vmul.f32 %v186, %v434
        %v461 = vmul.f32 %v187, %v444
        %v463 = vsel %vm190, %v445, 0
        %v466 = vsel %vm190, %v446, 0
        %v469 = vsel %vm190, %v447, 0
        %v472 = vsel %vm190, %v448, 0
        %v475 = vsel %vm190, %v449, 0
        %v478 = vsel %vm190, %v450, 0
        %v481 = vsel %vm190, %v451, 0
        %v484 = vsel %vm190, %v452, 0
        %v487 = vsel %vm190, %v453, 0
        %v490 = vsel %vm190, %v454, 0
        %v493 = vsel %vm190, %v455, 0
        %v496 = vsel %vm190, %v456, 0
        %v499 = vsel %vm190, %v457, 0
        %v502 = vsel %vm190, %v458, 0
        %v505 = vsel %vm190, %v459, 0
        %v508 = vsel %vm190, %v460, 0
        %v511 = vsel %vm190, %v461, 0
        %513 = vmatpush.xpose.msra.mxu0 %v511
        %514 = vmatpush.xpose.msra.mxu0 %v508
        %515 = vmatpush.xpose.msra.mxu0 %v505
        %516 = vmatpush.xpose.msra.mxu0 %v502
        %517 = vmatpush.xpose.msra.mxu0 %v499
        %518 = vmatpush.xpose.msra.mxu0 %v496
        %519 = vmatpush.xpose.msra.mxu0 %v493
        %520 = vmatpush.xpose.msra.mxu0 %v490
        %521 = vmatpush.xpose.msra.mxu0 %v487
        %522 = vmatpush.xpose.msra.mxu0 %v484
        %523 = vmatpush.xpose.msra.mxu0 %v481
        %524 = vmatpush.xpose.msra.mxu0 %v478
        %525 = vmatpush.xpose.msra.mxu0 %v475
        %526 = vmatpush.xpose.msra.mxu0 %v472
        %527 = vmatpush.xpose.msra.mxu0 %v469
        %528 = vmatpush.xpose.msra.mxu0 %v466
        %529 = vmatmul.f32.gmra.mxu0 %v463
        %v530 = vpop.f32.mrf.mxu0
        %v531 = vadd.f32 0.0, %v530
        %532 = vdwg.mxu0
        %v533 = vmul.f32 %v531, %v531
        %v534 = vsub.f32 1.0, %v533
        %v535 = vmax.f32 %v534, 0.0
        %v536 = vrsqrt.pop %v535
        %v537 = vmul.f32 %v536, %v535
        %v538 = vmul.f32 %v537, %v536
        %v539 = vmul.f32 0.5, %v538
        %v540 = vsub.f32 1.5, %v539
        %v541 = vmul.f32 %v536, %v540
        %v542 = vmul.f32 %v535, %v541
        %vm543 = vcmp.eq.f32.partialorder %v535, inf
        %v544 = vsel %vm543, %v535, %v542
        %vm545 = vcmp.eq.f32.partialorder %v535, 0.0
        %v546 = vand.u32 %v535, 2147483648
        %v547 = vsel %vm545, %v546, %v544
        %v548 = vmul.f32 %v531, 0.9800666
        %v549 = vmul.f32 %v547, 0.19866933
        %v550 = vsub.f32 %v548, %v549
        %vm551 = vcmp.gt.f32.partialorder %v531, -0.9800666
        %v552 = vsub.f32 %v531, 0.019933423
        %v553 = vsel %vm551, %v550, %v552
        %v554 = vlaneseq
        %v555 = vand.u32 %v554, 127
        %s556 = smul.u32 %s17, 128
        %v557 = vstv %s556
        %v558 = vadd.s32 %v555, %v557
        %559 = vset.pattern.permute.xlu0 0
        %560 = vperm.xlu0 %559, %v188
        %v561 = vpop.permute.xlu0 %560
        %vm562 = vcmp.eq.s32.totalorder %v558, %v561
        %v563 = vsel %vm562, %v553, %v531
        %v564 = vmul.f32 %v563, 32.0
        %565 = vst [vmem:[%s164] sm:$0xff] %v564
        %s566 = sand.u32 %s93, 1
        %s567 = scalar_lea.sflag [#allocation3], %s566
        %s568 = sand.u32 %s93, 1
        %s569 = smul.addr %s568, 8
        %s570 = scalar_lea.vmem [#allocation2], %s569
        // Predicated region
        $region33: #{tpu_custom_call.1} parent=31 // pred_check
          %p571 = pneg %p103
        $region34: #{tpu_custom_call.1} parent=31 // pred_check_branch
          %573 = sbr.rel (%p571) target = $region36
        $region35: #{tpu_custom_call.1} parent=31 // pred_region
          %575 = vsyncadd %s567, 0
          %s576 = smul.addr %s17, 8
          %s577 = scalar_lea.hbm %s3, %s576
          %s579 = sshll.u32 %s570, 4
          %s580 = int_to_ptr.vmem [resolvable:$true] %s579
          %s581 = sshll.u32 %s577, 4
          %s582 = int_to_ptr.hbm [resolvable:$true] %s581
          %584 = dma.vmem_to_hbm [thread:$0]  %s580, 128, %s582, %s567
        $region36: #{tpu_custom_call.1} parent=31 // pred_fallthru
          _
      $region32: #{tpu_custom_call.1} parent=5 // pred_fallthru
        _
      %p585 = scmp.le.s32.totalorder 2, %s12
      // Predicated region
      $region37: #{tpu_custom_call.1} parent=5 // pred_check
        %p586 = pneg %p585
      $region38: #{tpu_custom_call.1} parent=5 // pred_check_branch
        %588 = sbr.rel (%p586) target = $region40
      $region39: #{tpu_custom_call.1} parent=5 // pred_region
        %s589 = ssub.s32 %s12, 2
        // Predicated region
        $region41: #{tpu_custom_call.1} parent=39 // pred_check
          %p590 = pneg %p109
        $region42: #{tpu_custom_call.1} parent=39 // pred_check_branch
          %592 = sbr.rel (%p590) target = $region44
        $region43: #{tpu_custom_call.1} parent=39 // pred_region
          %s593 = sand.u32 %s94, 1
          %s594 = scalar_lea.sflag [#allocation3], %s593
          %s595 = sand.u32 %s94, 1
          %s596 = smul.addr %s595, 8
          %s597 = scalar_lea.vmem [#allocation2], %s596
          %599 = dma.done %s594, 128
        $region44: #{tpu_custom_call.1} parent=39 // pred_fallthru
          _
      $region40: #{tpu_custom_call.1} parent=5 // pred_fallthru
        _
    $region6: #{tpu_custom_call.1} parent=1 // loop_footer
      %s16 = sadd.s32 1, %s12
    $region7: #{tpu_custom_call.1} parent=1 // loop_footer_branch
      %11 = sbr.rel target = $region3
    $region8: #{tpu_custom_call.1} parent=1 // loop_exit
      _
    %600 = vsyncpa [#allocation3], 1
    %s601 = scalar_lea.sflag [#allocation3], 1
    %602 = vsyncpa %s601, 1

</llo_original>
